<compile_context>
chip_gen: v6e
topology: v6e:2x2x1
jax: 0.10.0
libtpu: 0.0.40
codegen_flags: <defaults>
</compile_context>

<pallas_src>
import functools

import jax
import jax.numpy as jnp
from jax.experimental import pallas as pl
from jax.experimental.pallas import tpu as pltpu


def _round_up(x, m):
    return ((x + m - 1) // m) * m


def _patch_embed_ln_kernel(x_ref, w_ref, p_ref, o_ref, *, inv_d):
    # x_ref: (tm, Kp) bf16 patch rows; w_ref: (Kp, Dp) bf16;
    # p_ref: (3, Dp) f32 = [bias; gamma; beta]; o_ref: (tm, Dp) bf16.
    # Kp/Dp are the padded (multiple-of-128) feature dims; the padded columns
    # of w/bias are zero, so h is exactly 0 there and drops out of the
    # LayerNorm statistics (inv_d = 1 / true embed_dim).
    bias = p_ref[0:1, :]
    gamma = p_ref[1:2, :]
    beta = p_ref[2:3, :]

    h = jnp.dot(x_ref[...], w_ref[...],
                preferred_element_type=jnp.float32) + bias

    # One-pass LayerNorm statistics over the true embed_dim.
    s1 = jnp.sum(h, axis=-1, keepdims=True)
    s2 = jnp.sum(h * h, axis=-1, keepdims=True)
    mu = s1 * inv_d
    var = jnp.maximum(s2 * inv_d - mu * mu, 0.0)
    hn = (h - mu) * jax.lax.rsqrt(var + 1e-6)

    # gamma/beta are zero in the padded columns -> padded output columns are 0.
    o_ref[...] = (hn * gamma + beta).astype(o_ref.dtype)


def patch_embed_pallas(x, w, params, *, tm, d_actual):
    """x: (Mp, Kp) bf16, Mp % tm == 0; w: (Kp, Dp) bf16; params: (3, Dp) f32."""
    Mp, Kp = x.shape
    _, Dp = w.shape
    assert Mp % tm == 0 and tm % 8 == 0
    assert Kp % 128 == 0 and Dp % 128 == 0
    grid = (Mp // tm,)
    kernel = functools.partial(_patch_embed_ln_kernel, inv_d=1.0 / float(d_actual))
    return pl.pallas_call(
        kernel,
        out_shape=jax.ShapeDtypeStruct((Mp, Dp), jnp.bfloat16),
        grid_spec=pltpu.PrefetchScalarGridSpec(
            num_scalar_prefetch=0,
            grid=grid,
            in_specs=[
                pl.BlockSpec((tm, Kp), lambda i: (i, 0)),   # patch rows (pipelined)
                pl.BlockSpec((Kp, Dp), lambda i: (0, 0)),   # weight (constant index -> no re-DMA)
                pl.BlockSpec((3, Dp), lambda i: (0, 0)),    # [bias; gamma; beta]
            ],
            out_specs=pl.BlockSpec((tm, Dp), lambda i: (i, 0)),
        ),
        compiler_params=pltpu.CompilerParams(
            dimension_semantics=("parallel",),
        ),
    )(x, w, params)


class VisionBackbonePallas:
    """Concrete VisionBackbone: ViT patch-embed + LayerNorm featurizer on TPU."""

    # Row-tile upper bound: 512 rows of bf16 x (Kp + Dp) columns, double
    # buffered, plus the resident bf16 weight stays in the low-MiB range even
    # at realistic ViT sizes (Kp ~ 768, Dp ~ 1152) — well under the 16/32 MiB
    # scoped VMEM defaults.
    _MAX_ROW_TILE = 512

    def __init__(self, vision_backbone_id="synthetic-vit-patch8",
                 image_resize_strategy="resize-naive",
                 default_image_size=16, in_channels=4,
                 patch_size=8, embed_dim=32):
        self.identifier = vision_backbone_id
        self.image_resize_strategy = image_resize_strategy
        self.default_image_size = default_image_size
        self.in_channels = in_channels
        self.patch_size = patch_size
        self._embed_dim = embed_dim
        self._grid = default_image_size // patch_size

        # Deterministic parameter init (synthetic; no checkpoint loading).
        key = jax.random.PRNGKey(0)
        kw, kb = jax.random.split(key)
        K = in_channels * patch_size * patch_size
        D = embed_dim
        Kp = _round_up(K, 128)
        Dp = _round_up(D, 128)
        self._k_actual = K
        self._k_padded = Kp
        self._embed_dim_padded = Dp

        self.w = (jax.random.normal(kw, (K, D), jnp.float32)
                  * (1.0 / jnp.sqrt(K)))
        self.b = jax.random.normal(kb, (D,), jnp.float32) * 0.02
        self.gamma = jnp.ones((D,), jnp.float32)
        self.beta = jnp.zeros((D,), jnp.float32)

        # Kernel-side parameters: pad K and embed_dim to multiples of 128 for
        # lane-dense/aligned MXU operands and output stores; weight pre-cast to
        # bf16 for the MXU.  Bias/gamma/beta fused into one (3, Dp) f32 slab.
        self.w_p = jnp.pad(self.w, ((0, Kp - K), (0, Dp - D))).astype(jnp.bfloat16)
        params = jnp.stack([self.b, self.gamma, self.beta], axis=0)  # (3, D)
        self.params_p = jnp.pad(params, ((0, 0), (0, Dp - D)))

    @property
    def embed_dim(self):
        return self._embed_dim

    @property
    def num_patches(self):
        return self._grid * self._grid

    @property
    def default_image_resolution(self):
        return (self.in_channels, self.default_image_size, self.default_image_size)

    @property
    def half_precision_dtype(self):
        return jnp.bfloat16

    def _row_tile(self, M):
        m8 = _round_up(M, 8)
        return m8 if m8 < self._MAX_ROW_TILE else self._MAX_ROW_TILE

    def forward(self, pixel_values):
        # pixel_values: (B, C, H, W)  [NCHW, as in PyTorch]
        B, C, H, W = pixel_values.shape
        P = self.patch_size
        gh, gw = H // P, W // P
        M = B * gh * gw
        K = C * P * P
        Kp = self._k_padded

        # Patchify glue (plain JAX): NCHW -> (M, K) with K-order (C, P, P).
        # Cast to bf16 so the materialized patch matrix costs half the HBM
        # bytes and feeds the MXU directly.
        # TODO(synk): fold the patchify transpose into the kernel (grid over
        # (B, gh) with a Squeezed BlockSpec + in-kernel einshape) to remove
        # this HBM round trip entirely.
        x = pixel_values.reshape(B, C, gh, P, gw, P)
        x = jnp.transpose(x, (0, 2, 4, 1, 3, 5)).reshape(M, K)
        x = x.astype(jnp.bfloat16)

        # Fixed row tile + padded M/K: every row is computed (no dropped tail),
        # the grid divides evenly, and (tm, Kp) is always (8, 128)-aligned.
        tm = self._row_tile(M)
        Mp = _round_up(M, tm)
        if Mp != M or Kp != K:
            x = jnp.pad(x, ((0, Mp - M), (0, Kp - K)))

        out = patch_embed_pallas(
            x, self.w_p, self.params_p, tm=tm, d_actual=self._embed_dim)
        out = out[:M, :self._embed_dim]
        return out.reshape(B, gh * gw, self._embed_dim)

    __call__ = forward


def _reference_forward(backbone, pixel_values):
    B, C, H, W = pixel_values.shape
    P = backbone.patch_size
    gh, gw = H // P, W // P
    x = pixel_values.reshape(B, C, gh, P, gw, P)
    x = jnp.transpose(x, (0, 2, 4, 1, 3, 5)).reshape(B * gh * gw, C * P * P)
    # Match the kernel's bf16 MXU inputs (f32 accumulation).
    xb = x.astype(jnp.bfloat16).astype(jnp.float32)
    wb = backbone.w.astype(jnp.bfloat16).astype(jnp.float32)
    h = xb @ wb + backbone.b
    mu = jnp.mean(h, axis=-1, keepdims=True)
    var = jnp.mean((h - mu) ** 2, axis=-1, keepdims=True)
    hn = (h - mu) * jax.lax.rsqrt(var + 1e-6)
    out = hn * backbone.gamma + backbone.beta
    return out.reshape(B, gh * gw, backbone.embed_dim)


if __name__ == "__main__":
    backbone = VisionBackbonePallas(
        default_image_size=16, in_channels=4, patch_size=8, embed_dim=32)

    key = jax.random.PRNGKey(0)
    pixel_values = jax.random.normal(key, (2, 4, 16, 16), jnp.float32)

    out = backbone(pixel_values)
    out = jax.block_until_ready(out)

    ref = _reference_forward(backbone, pixel_values)
    assert out.shape == (2, backbone.num_patches, backbone.embed_dim)
    assert out.dtype == jnp.bfloat16
    assert jnp.allclose(out.astype(jnp.float32), ref, atol=5e-2, rtol=5e-2)

    print("KERNEL_OK")
</pallas_src>

<mosaic_0001>
module attributes {stable_mosaic.version = 11 : i64} {
  func.func @_patch_embed_ln_kernel(%arg0: i32, %arg1: memref<8x256xbf16, #tpu.memory_space<vmem>>, %arg2: memref<256x128xbf16, #tpu.memory_space<vmem>>, %arg3: memref<3x128xf32, #tpu.memory_space<vmem>>, %arg4: memref<8x128xbf16, #tpu.memory_space<vmem>>) attributes {dimension_semantics = [#tpu.dimension_semantics<parallel>], iteration_bounds = array<i64: 1>, scalar_prefetch = 0 : i64, scratch_operands = 0 : i64, tpu.core_type = #tpu.core_type<tc>, window_params = [{transform_indices = @transform_0, window_bounds = array<i64: 8, 256>}, {pipeline_mode = #tpu.pipeline_mode<synchronous>, transform_indices = @transform_1, window_bounds = array<i64: 256, 128>}, {pipeline_mode = #tpu.pipeline_mode<synchronous>, transform_indices = @transform_2, window_bounds = array<i64: 3, 128>}, {transform_indices = @transform_3, window_bounds = array<i64: 8, 128>}]} {
    %c0 = arith.constant 0 : index
    %c0_0 = arith.constant 0 : index
    %0 = vector.load %arg3[%c0, %c0_0] : memref<3x128xf32, #tpu.memory_space<vmem>>, vector<1x128xf32>
    %c1 = arith.constant 1 : index
    %c0_1 = arith.constant 0 : index
    %1 = vector.load %arg3[%c1, %c0_1] : memref<3x128xf32, #tpu.memory_space<vmem>>, vector<1x128xf32>
    %c2 = arith.constant 2 : index
    %c0_2 = arith.constant 0 : index
    %2 = vector.load %arg3[%c2, %c0_2] : memref<3x128xf32, #tpu.memory_space<vmem>>, vector<1x128xf32>
    %c0_3 = arith.constant 0 : index
    %c0_4 = arith.constant 0 : index
    %3 = vector.load %arg1[%c0_3, %c0_4] : memref<8x256xbf16, #tpu.memory_space<vmem>>, vector<8x256xbf16>
    %c0_5 = arith.constant 0 : index
    %c0_6 = arith.constant 0 : index
    %4 = vector.load %arg2[%c0_5, %c0_6] : memref<256x128xbf16, #tpu.memory_space<vmem>>, vector<256x128xbf16>
    %cst = arith.constant dense<0.000000e+00> : vector<8x128xf32>
    %5 = tpu.matmul %3, %4, %cst {dimension_numbers = #tpu.dot_dimension_numbers<[1], [0], [0], [1], [0, 0, 1, 1], [], []>} : vector<8x256xbf16>, vector<256x128xbf16>, vector<8x128xf32> -> vector<8x128xf32>
    %6 = vector.broadcast %0 : vector<1x128xf32> to vector<8x128xf32>
    %7 = arith.addf %5, %6 : vector<8x128xf32>
    %cst_7 = arith.constant dense<0.000000e+00> : vector<8xf32>
    %8 = vector.multi_reduction <add>, %7, %cst_7 [1] : vector<8x128xf32> to vector<8xf32>
    %9 = vector.shape_cast %8 : vector<8xf32> to vector<8x1xf32>
    %10 = arith.mulf %7, %7 : vector<8x128xf32>
    %cst_8 = arith.constant dense<0.000000e+00> : vector<8xf32>
    %11 = vector.multi_reduction <add>, %10, %cst_8 [1] : vector<8x128xf32> to vector<8xf32>
    %12 = vector.shape_cast %11 : vector<8xf32> to vector<8x1xf32>
    %cst_9 = arith.constant 3.125000e-02 : f32
    %13 = vector.broadcast %cst_9 : f32 to vector<8x1xf32>
    %14 = arith.mulf %9, %13 : vector<8x1xf32>
    %cst_10 = arith.constant 3.125000e-02 : f32
    %15 = vector.broadcast %cst_10 : f32 to vector<8x1xf32>
    %16 = arith.mulf %12, %15 : vector<8x1xf32>
    %17 = arith.mulf %14, %14 : vector<8x1xf32>
    %18 = arith.subf %16, %17 : vector<8x1xf32>
    %cst_11 = arith.constant 0.000000e+00 : f32
    %19 = vector.broadcast %cst_11 : f32 to vector<8x1xf32>
    %20 = arith.maximumf %18, %19 : vector<8x1xf32>
    %21 = vector.broadcast %14 : vector<8x1xf32> to vector<8x128xf32>
    %22 = arith.subf %7, %21 : vector<8x128xf32>
    %cst_12 = arith.constant 9.99999997E-7 : f32
    %23 = vector.broadcast %cst_12 : f32 to vector<8x1xf32>
    %24 = arith.addf %20, %23 : vector<8x1xf32>
    %25 = math.rsqrt %24 : vector<8x1xf32>
    %26 = vector.broadcast %25 : vector<8x1xf32> to vector<8x128xf32>
    %27 = arith.mulf %22, %26 : vector<8x128xf32>
    %28 = vector.broadcast %1 : vector<1x128xf32> to vector<8x128xf32>
    %29 = arith.mulf %27, %28 : vector<8x128xf32>
    %30 = vector.broadcast %2 : vector<1x128xf32> to vector<8x128xf32>
    %31 = arith.addf %29, %30 : vector<8x128xf32>
    %32 = arith.truncf %31 : vector<8x128xf32> to vector<8x128xbf16>
    %c0_13 = arith.constant 0 : index
    %c0_14 = arith.constant 0 : index
    %33 = vector.load %arg4[%c0_13, %c0_14] : memref<8x128xbf16, #tpu.memory_space<vmem>>, vector<8x128xbf16>
    tpu.vector_store %arg4[%c0_13, %c0_14], %32 {strides = array<i32>} : memref<8x128xbf16, #tpu.memory_space<vmem>>, vector<8x128xbf16>,
    return
  }
  func.func @transform_0(%arg0: i32) -> (i32, i32) {
    %c0_i32 = arith.constant 0 : i32
    %c0_i32_0 = arith.constant 0 : i32
    return %arg0, %c0_i32 : i32, i32
  }
  func.func @transform_1(%arg0: i32) -> (i32, i32) {
    %c0_i32 = arith.constant 0 : i32
    %c0_i32_0 = arith.constant 0 : i32
    %c0_i32_1 = arith.constant 0 : i32
    return %c0_i32, %c0_i32_0 : i32, i32
  }
  func.func @transform_2(%arg0: i32) -> (i32, i32) {
    %c0_i32 = arith.constant 0 : i32
    %c0_i32_0 = arith.constant 0 : i32
    %c0_i32_1 = arith.constant 0 : i32
    return %c0_i32, %c0_i32_0 : i32, i32
  }
  func.func @transform_3(%arg0: i32) -> (i32, i32) {
    %c0_i32 = arith.constant 0 : i32
    %c0_i32_0 = arith.constant 0 : i32
    return %arg0, %c0_i32 : i32, i32
  }
}

</mosaic_0001>

<llo_original>
// kernel: tpu_custom_call.1
$region0: #{tpu_custom_call.1}
  #allocation0 [shape = 'u32[]', space=smem, size = 0x4, offset = 0x4, fixed_abs, tag = 'smem constant byte address 0x4 - core index']
  #allocation1 [shape = 'u32[144,128]{1,0:T(1,128)}', space=vmem, size = 0x12000, scoped, tag = 'internal scratch']
  %s0 = inlined_call_operand.hbm [shape: bf16[8,256], index: 0, kind: input, shape index: {}]
  %s1 = inlined_call_operand.hbm [shape: bf16[256,128], index: 1, kind: input, shape index: {}]
  %s2 = inlined_call_operand.hbm [shape: f32[3,128], index: 2, kind: input, shape index: {}]
  %s3 = inlined_call_operand.hbm [shape: bf16[8,128], index: 3, kind: output, shape index: {}]
  %s4 = sld [smem:[#allocation0]]
  $region34: #{tpu_custom_call.1} parent=0
    _
  %s6 = ssub.s32 1, %s4
  %s7 = scalar_select 0, %s6, %s4
  $region1: #{tpu_custom_call.1} parent=0
    #allocation2 [shape = 'u8[4096]{0}', space=vmem, size = 0x1000, scoped, tag = 'input window, operand 0, single buffered']
    #allocation3 [shape = 's32[1]{0}', space=sflag, size = 0x4, scoped, tag = 'scoped memory for tpu_custom_call.1']
    #allocation4 [shape = 's32[1]{0}', space=sflag, size = 0x4, scoped, tag = 'scoped memory for tpu_custom_call.1']
    #allocation5 [shape = 'u8[65536]{0}', space=vmem, size = 0x10000, scoped, tag = 'input window, operand 1, single buffered']
    #allocation6 [shape = 's32[1]{0}', space=sflag, size = 0x4, scoped, tag = 'scoped memory for tpu_custom_call.1']
    #allocation7 [shape = 'u8[2048]{0}', space=vmem, size = 0x800, scoped, tag = 'input window, operand 2, single buffered']
    #allocation8 [shape = 'u8[2048]{0}', space=vmem, size = 0x800, scoped, tag = 'output window, operand 0, single buffered']
    %8 = vsyncpa [#allocation3], 0
    %9 = vsyncpa [#allocation6], 0
    %10 = vsyncpa [#allocation4], 0
    // Predicated region
    $region2: #{tpu_custom_call.1} parent=1 // pred_check
      _
    $region3: #{tpu_custom_call.1} parent=1 // pred_check_branch
      %12 = sbr.rel (0) target = $region5
    $region4: #{tpu_custom_call.1} parent=1 // pred_region
      %s14 = ssub.s32 128, 128
      %15 = vsyncadd [#allocation3], %s14
      %s17 = sshll.u32 [#allocation2], 4
      %s18 = int_to_ptr.vmem [resolvable:$true] %s17
      %20 = dma.hbm_to_vmem [thread:$0]  %s0, 128, %s18, [#allocation3]
    $region5: #{tpu_custom_call.1} parent=1 // pred_fallthru
      _
    // Predicated region
    $region6: #{tpu_custom_call.1} parent=1 // pred_check
      _
    $region7: #{tpu_custom_call.1} parent=1 // pred_check_branch
      %22 = sbr.rel (0) target = $region9
    $region8: #{tpu_custom_call.1} parent=1 // pred_region
      %s24 = ssub.s32 2048, 2048
      %25 = vsyncadd [#allocation6], %s24
      %s26 = sshll.u32 [#allocation5], 4
      %s27 = int_to_ptr.vmem [resolvable:$true] %s26
      %32 = dma.hbm_to_vmem [thread:$0]  %s1, 2048, %s27, [#allocation6], 64, 64, 4
    $region9: #{tpu_custom_call.1} parent=1 // pred_fallthru
      _
    // Predicated region
    $region10: #{tpu_custom_call.1} parent=1 // pred_check
      _
    $region11: #{tpu_custom_call.1} parent=1 // pred_check_branch
      %34 = sbr.rel (0) target = $region13
    $region12: #{tpu_custom_call.1} parent=1 // pred_region
      %s36 = ssub.s32 64, 64
      %37 = vsyncadd [#allocation6], %s36
      %s39 = sshll.u32 [#allocation7], 4
      %s40 = int_to_ptr.vmem [resolvable:$true] %s39
      %42 = dma.hbm_to_vmem [thread:$0]  %s2, 64, %s40, [#allocation6]
    $region13: #{tpu_custom_call.1} parent=1 // pred_fallthru
      _
    // Predicated region
    $region14: #{tpu_custom_call.1} parent=1 // pred_check
      _
    $region15: #{tpu_custom_call.1} parent=1 // pred_check_branch
      %44 = sbr.rel (0) target = $region17
    $region16: #{tpu_custom_call.1} parent=1 // pred_region
      %45 = dma.done [#allocation3], 128
    $region17: #{tpu_custom_call.1} parent=1 // pred_fallthru
      _
    // Predicated region
    $region18: #{tpu_custom_call.1} parent=1 // pred_check
      _
    $region19: #{tpu_custom_call.1} parent=1 // pred_check_branch
      %47 = sbr.rel (0) target = $region21
    $region20: #{tpu_custom_call.1} parent=1 // pred_region
      %48 = dma.done [#allocation6], 2048
    $region21: #{tpu_custom_call.1} parent=1 // pred_fallthru
      _
    // Predicated region
    $region22: #{tpu_custom_call.1} parent=1 // pred_check
      _
    $region23: #{tpu_custom_call.1} parent=1 // pred_check_branch
      %50 = sbr.rel (0) target = $region25
    $region24: #{tpu_custom_call.1} parent=1 // pred_region
      %51 = dma.done [#allocation6], 64
    $region25: #{tpu_custom_call.1} parent=1 // pred_fallthru
      _
    %v53 = vld [vmem:[#allocation7] sm:$0x1]
    %v54 = vld [vmem:[#allocation7 + $0x1] sm:$0x1]
    %v55 = vld [vmem:[#allocation7 + $0x2] sm:$0x1]
    %v56 = vld [vmem:[#allocation2] sm:$0xff]
    %v57 = vld [vmem:[#allocation5] sm:$0xf]
    %v58 = vld [vmem:[#allocation5 + $0x4] sm:$0xf]
    %v59 = vld [vmem:[#allocation5 + $0x8] sm:$0xf]
    %v60 = vld [vmem:[#allocation5 + $0xc] sm:$0xf]
    %v61 = vld [vmem:[#allocation5 + $0x10] sm:$0xf]
    %v62 = vld [vmem:[#allocation5 + $0x14] sm:$0xf]
    %v63 = vld [vmem:[#allocation5 + $0x18] sm:$0xf]
    %v64 = vld [vmem:[#allocation5 + $0x1c] sm:$0xf]
    %v65 = vld [vmem:[#allocation5 + $0x20] sm:$0xf]
    %v66 = vld [vmem:[#allocation5 + $0x24] sm:$0xf]
    %v67 = vld [vmem:[#allocation5 + $0x28] sm:$0xf]
    %v68 = vld [vmem:[#allocation5 + $0x2c] sm:$0xf]
    %v69 = vld [vmem:[#allocation5 + $0x30] sm:$0xf]
    %v70 = vld [vmem:[#allocation5 + $0x34] sm:$0xf]
    %v71 = vld [vmem:[#allocation5 + $0x38] sm:$0xf]
    %v72 = vld [vmem:[#allocation5 + $0x3c] sm:$0xf]
    %v73 = vld [vmem:[#allocation5 + $0x40] sm:$0xf]
    %v74 = vld [vmem:[#allocation5 + $0x44] sm:$0xf]
    %v75 = vld [vmem:[#allocation5 + $0x48] sm:$0xf]
    %v76 = vld [vmem:[#allocation5 + $0x4c] sm:$0xf]
    %v77 = vld [vmem:[#allocation5 + $0x50] sm:$0xf]
    %v78 = vld [vmem:[#allocation5 + $0x54] sm:$0xf]
    %v79 = vld [vmem:[#allocation5 + $0x58] sm:$0xf]
    %v80 = vld [vmem:[#allocation5 + $0x5c] sm:$0xf]
    %v81 = vld [vmem:[#allocation5 + $0x60] sm:$0xf]
    %v82 = vld [vmem:[#allocation5 + $0x64] sm:$0xf]
    %v83 = vld [vmem:[#allocation5 + $0x68] sm:$0xf]
    %v84 = vld [vmem:[#allocation5 + $0x6c] sm:$0xf]
    %v85 = vld [vmem:[#allocation5 + $0x70] sm:$0xf]
    %v86 = vld [vmem:[#allocation5 + $0x74] sm:$0xf]
    %v87 = vld [vmem:[#allocation5 + $0x78] sm:$0xf]
    %v88 = vld [vmem:[#allocation5 + $0x7c] sm:$0xf]
    %v89 = vlaneseq
    %v90 = vshrl.u32 %v89, 7
    %v91 = vsub.s32 0, %v90
    %v92 = vrot.slane %v53, %v91
    %v94 = vunpack.c.l.b16 %v56
    %v95 = vunpack.c.h.b16 %v56
    %v96 = vpack.c.b16 %v94, %v94
    %v97 = vpack.c.b16 %v95, %v95
    %v132 = vunpack.c.l.b16 %v57
    %v133 = vunpack.c.l.b16 %v58
    %v134 = vunpack.c.l.b16 %v59
    %v135 = vunpack.c.l.b16 %v60
    %v136 = vunpack.c.l.b16 %v61
    %v137 = vunpack.c.l.b16 %v62
    %v138 = vunpack.c.l.b16 %v63
    %v139 = vunpack.c.l.b16 %v64
    %v140 = vunpack.c.l.b16 %v65
    %v141 = vunpack.c.l.b16 %v66
    %v142 = vunpack.c.l.b16 %v67
    %v143 = vunpack.c.l.b16 %v68
    %v144 = vunpack.c.l.b16 %v69
    %v145 = vunpack.c.l.b16 %v70
    %v146 = vunpack.c.l.b16 %v71
    %v147 = vunpack.c.l.b16 %v72
    %v148 = vunpack.c.l.b16 %v73
    %v149 = vunpack.c.l.b16 %v74
    %v150 = vunpack.c.l.b16 %v75
    %v151 = vunpack.c.l.b16 %v76
    %v152 = vunpack.c.l.b16 %v77
    %v153 = vunpack.c.l.b16 %v78
    %v154 = vunpack.c.l.b16 %v79
    %v155 = vunpack.c.l.b16 %v80
    %v156 = vunpack.c.l.b16 %v81
    %v157 = vunpack.c.l.b16 %v82
    %v158 = vunpack.c.l.b16 %v83
    %v159 = vunpack.c.l.b16 %v84
    %v160 = vunpack.c.l.b16 %v85
    %v161 = vunpack.c.l.b16 %v86
    %v162 = vunpack.c.l.b16 %v87
    %v163 = vunpack.c.l.b16 %v88
    %v164 = vpack.c.b16 %v133, %v132
    %v165 = vpack.c.b16 %v135, %v134
    %v166 = vpack.c.b16 %v137, %v136
    %v167 = vpack.c.b16 %v139, %v138
    %v168 = vpack.c.b16 %v141, %v140
    %v169 = vpack.c.b16 %v143, %v142
    %v170 = vpack.c.b16 %v145, %v144
    %v171 = vpack.c.b16 %v147, %v146
    %v172 = vpack.c.b16 %v149, %v148
    %v173 = vpack.c.b16 %v151, %v150
    %v174 = vpack.c.b16 %v153, %v152
    %v175 = vpack.c.b16 %v155, %v154
    %v176 = vpack.c.b16 %v157, %v156
    %v177 = vpack.c.b16 %v159, %v158
    %v178 = vpack.c.b16 %v161, %v160
    %v179 = vpack.c.b16 %v163, %v162
    %196 = vmatprep.subr.bf16.mxu0 0
    %197 = vmatpush1.bf16.msra.mxu0 %v171
    %198 = vmatprep.subr.bf16.mxu0 0
    %199 = vmatpush1.bf16.msra.mxu0 %v170
    %200 = vmatprep.subr.bf16.mxu0 0
    %201 = vmatpush1.bf16.msra.mxu0 %v169
    %202 = vmatprep.subr.bf16.mxu0 0
    %203 = vmatpush1.bf16.msra.mxu0 %v168
    %204 = vmatprep.subr.bf16.mxu0 0
    %205 = vmatpush1.bf16.msra.mxu0 %v167
    %206 = vmatprep.subr.bf16.mxu0 0
    %207 = vmatpush1.bf16.msra.mxu0 %v166
    %208 = vmatprep.subr.bf16.mxu0 0
    %209 = vmatpush1.bf16.msra.mxu0 %v165
    %210 = vmatprep.subr.bf16.mxu0 0
    %211 = vmatpush1.bf16.msra.mxu0 %v164
    %212 = vmatprep.subr.bf16.mxu0 0
    %213 = vmatpush2.bf16.msra.mxu0 %v179
    %214 = vmatprep.subr.bf16.mxu0 0
    %215 = vmatpush2.bf16.msra.mxu0 %v178
    %216 = vmatprep.subr.bf16.mxu0 0
    %217 = vmatpush2.bf16.msra.mxu0 %v177
    %218 = vmatprep.subr.bf16.mxu0 0
    %219 = vmatpush2.bf16.msra.mxu0 %v176
    %220 = vmatprep.subr.bf16.mxu0 0
    %221 = vmatpush2.bf16.msra.mxu0 %v175
    %222 = vmatprep.subr.bf16.mxu0 0
    %223 = vmatpush2.bf16.msra.mxu0 %v174
    %224 = vmatprep.subr.bf16.mxu0 0
    %225 = vmatpush2.bf16.msra.mxu0 %v173
    %226 = vmatprep.subr.bf16.mxu0 0
    %227 = vmatpush2.bf16.msra.mxu0 %v172
    %228 = vmatprep.mubr.bf16.mxu0 %v97
    %229 = vmatmul.mubr.bf16.gmra.mxu0 %v96
    %v230 = vpop.f32.mrf.mxu0
    %v231 = vadd.f32 %v92, %v230
    %v232 = vpop.f32.mrf.mxu0
    %v233 = vpop.f32.mrf.mxu0
    %v234 = vpop.f32.mrf.mxu0
    %235 = vdwg.mxu0
    %236 = vadd.xlane.f32.xlu0 %v231
    %v237 = vpop.xlane.xlu0 %236
    %v238 = vmul.f32 %v231, %v231
    %239 = vadd.xlane.f32.xlu0 %v238
    %v240 = vpop.xlane.xlu0 %239
    %v241 = vmul.f32 %v237, 0.03125
    %v242 = vmul.f32 %v240, 0.03125
    %v243 = vmul.f32 %v241, %v241
    %v244 = vsub.f32 %v242, %v243
    %v245 = vmax.f32 %v244, 0.0
    %v246 = vsub.f32 %v231, %v241
    %v247 = vadd.f32 %v245, 1e-06
    %v248 = vrsqrt.pop %v247
    %v249 = vmul.f32 %v246, %v248
    %v250 = vlaneseq
    %v251 = vshrl.u32 %v250, 7
    %v252 = vsub.s32 0, %v251
    %v253 = vrot.slane %v54, %v252
    %v254 = vmul.f32 %v249, %v253
    %v255 = vlaneseq
    %v256 = vshrl.u32 %v255, 7
    %v257 = vsub.s32 0, %v256
    %v258 = vrot.slane %v55, %v257
    %v259 = vadd.f32 %v254, %v258
    %v260 = vpack.c.bf16 %v259, %v259
    %261 = vst [vmem:[#allocation8] sm:$0xf] %v260
    // Predicated region
    $region26: #{tpu_custom_call.1} parent=1 // pred_check
      _
    $region27: #{tpu_custom_call.1} parent=1 // pred_check_branch
      %263 = sbr.rel (0) target = $region29
    $region28: #{tpu_custom_call.1} parent=1 // pred_region
      %s265 = ssub.s32 64, 64
      %266 = vsyncadd [#allocation4], %s265
      %s268 = sshll.u32 [#allocation8], 4
      %s269 = int_to_ptr.vmem [resolvable:$true] %s268
      %271 = dma.vmem_to_hbm [thread:$0]  %s269, 64, %s3, [#allocation4]
    $region29: #{tpu_custom_call.1} parent=1 // pred_fallthru
      _
    // Predicated region
    $region30: #{tpu_custom_call.1} parent=1 // pred_check
      _
    $region31: #{tpu_custom_call.1} parent=1 // pred_check_branch
      %273 = sbr.rel (0) target = $region33
    $region32: #{tpu_custom_call.1} parent=1 // pred_region
      %274 = dma.done [#allocation4], 64
    $region33: #{tpu_custom_call.1} parent=1 // pred_fallthru
      _
    %275 = vsyncpa [#allocation3], 1
    %276 = vsyncpa [#allocation6], 1
    %277 = vsyncpa [#allocation4], 1

</llo_original>
